<compile_context>
chip_gen: v7x
topology: tpu7x:2x2x1
jax: 0.10.0
libtpu: 0.0.40
codegen_flags: <defaults>
</compile_context>

<pallas_src>
import functools

import jax
import jax.numpy as jnp
from jax.experimental import pallas as pl
from jax.experimental.pallas import tpu as pltpu


def _round_up(v, m):
    return (v + m - 1) // m * m


def _vmem_capacity_bytes():
    try:
        return int(pltpu.get_tpu_info().vmem_capacity_bytes)
    except Exception:
        return 128 * 2**20


def _is_v5e():
    try:
        kind = jax.devices()[0].device_kind.lower()
        return ("v5 lite" in kind) or ("v5e" in kind) or ("v5litepod" in kind)
    except Exception:
        return False


def _halo_rows(tl, P):
    """Rows of the 'previous tile' block used as the causal halo source.
    Multiple of 8, >= P, divides tl (falls back to tl)."""
    if tl % 8 != 0:
        return tl                       # tl == full length (full-dim block)
    ph = _round_up(max(P, 1), 8)
    while ph < tl and tl % ph != 0:
        ph += 8
    return min(ph, tl)


def _pick_seq_tile(L, P, N, kwidth, cin_p, f_p, cres_p, cbytes, vmem_budget):
    """Largest multiple-of-8 divisor of L covering the receptive field P whose
    blocks + weights + intermediates fit the per-generation VMEM budget.
    When N == 1, prefer tiles giving >= 2 grid blocks (v7x megacore)."""
    f32 = 4

    def vmem_use(t):
        ph = _halo_rows(t, P)
        blocks = (2 * t * cin_p * f32            # x_cur (double-buffered)
                  + 2 * ph * cin_p * f32         # halo block (double-buffered)
                  + 2 * t * cin_p * f32          # y
                  + 2 * t * cres_p * f32)        # sh
        weights = (2 * (kwidth * cin_p * f_p + f_p * (cin_p + cres_p)) * cbytes
                   + 2 * (2 * f_p + cin_p + cres_p) * f32)
        interm = (t * kwidth * cin_p * cbytes    # im2col lhs / tap temporaries
                  + 2 * t * f_p * f32            # h, a
                  + t * f_p * cbytes             # a cast
                  + t * (cin_p + cres_p) * f32)  # fused epilogue output
        return blocks + weights + interm

    cands = [t for t in range(8, L + 1, 8)
             if L % t == 0 and t >= P and vmem_use(t) <= vmem_budget]
    if not cands:
        return L                                  # fall back to a single tile
    if N == 1:
        multi = [t for t in cands if L // t >= 2]
        if multi:
            cands = multi
    return max(cands)


def _res_ar_kernel(xprev_ref, xcur_ref, wdil_ref, bdil_ref, alpha_ref,
                   wcat_ref, bcat_ref, y_ref, sh_ref, *,
                   tl, pad, ph, kwidth, dilation, cin_p, cres_p,
                   fuse_taps, compute_dtype):
    """One (batch, seq-tile) block per grid step; channels-last, lane-padded.

    xprev_ref : (1, ph, Cin_p)   last `ph` rows of the previous seq tile
    xcur_ref  : (1, tl, Cin_p)   current seq tile
    wdil_ref  : (kwidth*Cin_p, F_p)  im2col dilated-conv weight (compute_dtype)
    bdil_ref  : (1, F_p)  f32
    alpha_ref : (1, F_p)  f32        PReLU per-channel slope
    wcat_ref  : (F_p, Cin_p+Cres_p)  fused [skip | res] 1x1 weights
    bcat_ref  : (1, Cin_p+Cres_p)    fused biases
    y_ref     : (1, tl, Cin_p)
    sh_ref    : (1, tl, Cres_p)
    """
    i = pl.program_id(1)
    x_cur = xcur_ref[0]                                    # (tl, Cin_p) f32

    if pad > 0:
        halo = xprev_ref[0, ph - pad:, :]                  # (pad, Cin_p)
        halo = jnp.where(i > 0, halo, 0.0)                 # causal zero-pad @ tile 0
    else:
        halo = None

    def tap(k):
        off = k * dilation
        n_h = pad - off                                    # halo rows for this tap
        if n_h > 0:
            return jnp.concatenate([halo[off:, :], x_cur[:tl - n_h, :]], axis=0)
        return x_cur

    if fuse_taps and kwidth > 1:
        # im2col: one deep MXU matmul of depth kwidth*Cin_p (v6e/v7x).
        lhs = jnp.concatenate([tap(k) for k in range(kwidth)], axis=-1)
        h = jnp.dot(lhs.astype(compute_dtype), wdil_ref[...],
                    preferred_element_type=jnp.float32)
    else:
        # per-tap K=Cin_p dots accumulated in f32 (preferred on v5e).
        h = jnp.zeros((tl, wdil_ref.shape[-1]), jnp.float32)
        for k in range(kwidth):
            wk = wdil_ref[k * cin_p:(k + 1) * cin_p, :]
            h = h + jnp.dot(tap(k).astype(compute_dtype), wk,
                            preferred_element_type=jnp.float32)
    h = h + bdil_ref[...]

    # PReLU (alpha per channel; alpha=0 -> ReLU), f32 on the VPU.
    a = jnp.where(h > 0.0, h, alpha_ref[...] * h)

    # Fused [skip | res] 1x1 convs: one matmul, split columns afterwards.
    out = jnp.dot(a.astype(compute_dtype), wcat_ref[...],
                  preferred_element_type=jnp.float32) + bcat_ref[...]
    y_ref[0] = (x_cur + out[:, :cin_p]).astype(y_ref.dtype)
    sh_ref[0] = out[:, cin_p:].astype(sh_ref.dtype)


def pack_params(params, *, kwidth, compute_dtype=jnp.bfloat16):
    """Pad/transpose/cast the PyTorch-layout weights once (hoist out of the
    per-step call when the module is applied repeatedly)."""
    w_dil, b_dil, alpha, w_skip, b_skip, w_res, b_res = params
    fmaps, ninp, kw = w_dil.shape
    assert kw == kwidth
    cres = w_res.shape[0]
    cin_p = _round_up(ninp, 128)
    f_p = _round_up(fmaps, 128)
    cres_p = _round_up(cres, 128)

    # im2col weight: w_mat[k*Cin_p + c, f] = w_dil[f, c, k]
    w_pad = jnp.pad(w_dil, ((0, f_p - fmaps), (0, cin_p - ninp), (0, 0)))
    w_mat = jnp.transpose(w_pad, (2, 1, 0)).reshape(
        kwidth * cin_p, f_p).astype(compute_dtype)

    w_skip_io = jnp.pad(w_skip[:, :, 0].T, ((0, f_p - fmaps), (0, cin_p - ninp)))
    w_res_io = jnp.pad(w_res[:, :, 0].T, ((0, f_p - fmaps), (0, cres_p - cres)))
    w_cat = jnp.concatenate([w_skip_io, w_res_io], axis=1).astype(compute_dtype)

    b_dil2 = jnp.pad(b_dil, (0, f_p - fmaps)).reshape(1, f_p).astype(jnp.float32)
    alpha2 = jnp.pad(alpha, (0, f_p - fmaps)).reshape(1, f_p).astype(jnp.float32)
    b_cat = jnp.concatenate(
        [jnp.pad(b_skip, (0, cin_p - ninp)),
         jnp.pad(b_res, (0, cres_p - cres))]).reshape(
             1, cin_p + cres_p).astype(jnp.float32)

    packed = (w_mat, b_dil2, alpha2, w_cat, b_cat)
    dims = dict(ninp=ninp, fmaps=fmaps, cres=cres,
                cin_p=cin_p, f_p=f_p, cres_p=cres_p)
    return packed, dims


def res_ar_forward_packed(x, packed, dims, *, kwidth, dilation, seq_tile=None,
                          compute_dtype=jnp.bfloat16, fuse_taps=None,
                          channels_last=False):
    w_mat, b_dil2, alpha2, w_cat, b_cat = packed
    cin, cres = dims['ninp'], dims['cres']
    cin_p, f_p, cres_p = dims['cin_p'], dims['f_p'], dims['cres_p']
    P = (kwidth - 1) * dilation
    cbytes = jnp.dtype(compute_dtype).itemsize

    if fuse_taps is None:
        fuse_taps = not _is_v5e()      # v5e prefers per-tap K=128 dots

    # channels-last relayout only at the model boundary (channels_last=True
    # lets stacked ResAR blocks skip this HBM round-trip entirely).
    x_nlc = x if channels_last else jnp.transpose(x, (0, 2, 1))
    N, L, _ = x_nlc.shape
    if cin_p != cin:
        x_nlc = jnp.pad(x_nlc, ((0, 0), (0, 0), (0, cin_p - cin)))

    # Per-generation VMEM budgeting: ~51 MiB on v7x, ~102 MiB on v5e/v6e.
    vmem_cap = _vmem_capacity_bytes()
    vmem_limit = min(int(0.80 * vmem_cap), 112 * 2**20)
    tile_budget = max(vmem_limit - 4 * 2**20, 8 * 2**20)

    if seq_tile is None:
        seq_tile = _pick_seq_tile(L, P, N, kwidth, cin_p, f_p, cres_p,
                                  cbytes, tile_budget)
    tl = int(seq_tile)
    assert L % tl == 0, "seq_tile must divide L"
    assert tl % 8 == 0 or tl == L, "seq_tile must be a multiple of 8"
    assert tl >= P, "seq_tile must cover the causal receptive field P"
    nL = L // tl
    ph = _halo_rows(tl, P)             # halo block rows (<< tl in general)
    hb = tl // ph                      # halo blocks per sequence tile

    kernel = functools.partial(
        _res_ar_kernel, tl=tl, pad=P, ph=ph, kwidth=kwidth, dilation=dilation,
        cin_p=cin_p, cres_p=cres_p, fuse_taps=bool(fuse_taps),
        compute_dtype=compute_dtype)

    grid_spec = pltpu.PrefetchScalarGridSpec(
        num_scalar_prefetch=0,
        grid=(N, nL),
        in_specs=[
            # halo: only the last Ph rows of the previous tile (clamped @ i=0)
            pl.BlockSpec((1, ph, cin_p),
                         lambda n, i: (n, jnp.maximum(i * hb - 1, 0), 0)),
            # current sequence tile
            pl.BlockSpec((1, tl, cin_p), lambda n, i: (n, i, 0)),
            # weights / biases: constant index maps -> DMA'd once
            pl.BlockSpec((kwidth * cin_p, f_p), lambda n, i: (0, 0)),
            pl.BlockSpec((1, f_p), lambda n, i: (0, 0)),
            pl.BlockSpec((1, f_p), lambda n, i: (0, 0)),
            pl.BlockSpec((f_p, cin_p + cres_p), lambda n, i: (0, 0)),
            pl.BlockSpec((1, cin_p + cres_p), lambda n, i: (0, 0)),
        ],
        out_specs=[
            pl.BlockSpec((1, tl, cin_p), lambda n, i: (n, i, 0)),
            pl.BlockSpec((1, tl, cres_p), lambda n, i: (n, i, 0)),
        ],
    )

    flops = 2 * N * L * (kwidth * cin_p * f_p + f_p * (cin_p + cres_p))
    bytes_accessed = (N * L * cin_p * 4
                      + N * nL * ph * cin_p * 4
                      + N * L * (cin_p + cres_p) * 4
                      + (kwidth * cin_p * f_p + f_p * (cin_p + cres_p)) * cbytes)
    cost = pl.CostEstimate(flops=flops, transcendentals=0,
                           bytes_accessed=bytes_accessed)

    y_nlc, sh_nlc = pl.pallas_call(
        kernel,
        out_shape=(jax.ShapeDtypeStruct((N, L, cin_p), x_nlc.dtype),
                   jax.ShapeDtypeStruct((N, L, cres_p), x_nlc.dtype)),
        grid_spec=grid_spec,
        compiler_params=pltpu.CompilerParams(
            dimension_semantics=("parallel", "parallel"),
            vmem_limit_bytes=vmem_limit),
        cost_estimate=cost,
    )(x_nlc, x_nlc, w_mat, b_dil2, alpha2, w_cat, b_cat)

    y_nlc = y_nlc[..., :cin]
    sh_nlc = sh_nlc[..., :cres]
    if channels_last:
        return y_nlc, sh_nlc
    return jnp.transpose(y_nlc, (0, 2, 1)), jnp.transpose(sh_nlc, (0, 2, 1))


def res_ar_module_forward(x_ncl, params, *, kwidth, dilation, seq_tile=None,
                          compute_dtype=jnp.bfloat16, fuse_taps=None,
                          channels_last=False):
    """x_ncl: (N, Cin, L) float32 (PyTorch Conv1d layout) unless channels_last.
    Returns (y, sh) in the same layout."""
    packed, dims = pack_params(params, kwidth=kwidth, compute_dtype=compute_dtype)
    return res_ar_forward_packed(x_ncl, packed, dims, kwidth=kwidth,
                                 dilation=dilation, seq_tile=seq_tile,
                                 compute_dtype=compute_dtype,
                                 fuse_taps=fuse_taps,
                                 channels_last=channels_last)


def init_params(key, ninp, fmaps, res_fmaps, kwidth):
    """Deterministic synthetic parameter init (PyTorch Conv1d weight layouts)."""
    k1, k2, k3, k4, k5, k6 = jax.random.split(key, 6)
    w_dil = 0.1 * jax.random.normal(k1, (fmaps, ninp, kwidth), jnp.float32)
    b_dil = 0.1 * jax.random.normal(k2, (fmaps,), jnp.float32)
    alpha = jnp.zeros((fmaps,), jnp.float32)          # PReLU(fmaps, init=0)
    w_skip = 0.1 * jax.random.normal(k3, (ninp, fmaps, 1), jnp.float32)
    b_skip = 0.1 * jax.random.normal(k4, (ninp,), jnp.float32)
    w_res = 0.1 * jax.random.normal(k5, (res_fmaps, fmaps, 1), jnp.float32)
    b_res = 0.1 * jax.random.normal(k6, (res_fmaps,), jnp.float32)
    return (w_dil, b_dil, alpha, w_skip, b_skip, w_res, b_res)


def _reference(x_ncl, params, kwidth, dilation):
    """Pure-JAX reference of ResARModule.forward (norm=None, PReLU init=0)."""
    w_dil, b_dil, alpha, w_skip, b_skip, w_res, b_res = params
    P = (kwidth - 1) * dilation
    L = x_ncl.shape[-1]
    xp = jnp.pad(x_ncl, ((0, 0), (0, 0), (P, 0)))
    taps = jnp.stack([xp[:, :, k * dilation:k * dilation + L]
                      for k in range(kwidth)], axis=-1)            # (N,C,L,k)
    hp = jax.lax.Precision.HIGHEST
    h = jnp.einsum('fck,nclk->nfl', w_dil, taps, precision=hp) + b_dil[None, :, None]
    a = jnp.where(h > 0, h, alpha[None, :, None] * h)
    skip = jnp.einsum('cf,nfl->ncl', w_skip[:, :, 0], a, precision=hp) + b_skip[None, :, None]
    y = x_ncl + skip
    sh = jnp.einsum('rf,nfl->nrl', w_res[:, :, 0], a, precision=hp) + b_res[None, :, None]
    return y, sh


if __name__ == "__main__":
    # Small shapes consistent with the module: Conv1d input is (N, Cin, L).
    N, ninp, fmaps, res_fmaps, L = 2, 4, 8, 4, 16
    kwidth, dilation = 3, 2

    key = jax.random.PRNGKey(0)
    kx, kp = jax.random.split(key)
    x = jax.random.normal(kx, (N, ninp, L), jnp.float32)
    params = init_params(kp, ninp, fmaps, res_fmaps, kwidth)
    y_ref, sh_ref = _reference(x, params, kwidth, dilation)

    # 1) f32 path, explicit seq_tile=8 -> two sequence tiles: exercises the
    #    causal-halo fetch from the previous tile (fused im2col path).
    y, sh = res_ar_module_forward(x, params, kwidth=kwidth, dilation=dilation,
                                  seq_tile=8, compute_dtype=jnp.float32)
    jax.block_until_ready((y, sh))
    assert y.shape == (N, ninp, L) and sh.shape == (N, res_fmaps, L)
    assert jnp.allclose(y, y_ref, rtol=1e-2, atol=1e-2)
    assert jnp.allclose(sh, sh_ref, rtol=1e-2, atol=1e-2)

    # 2) f32 path, per-tap (v5e-style) kernel variant.
    y2, sh2 = res_ar_module_forward(x, params, kwidth=kwidth, dilation=dilation,
                                    seq_tile=8, compute_dtype=jnp.float32,
                                    fuse_taps=False)
    jax.block_until_ready((y2, sh2))
    assert jnp.allclose(y2, y_ref, rtol=1e-2, atol=1e-2)
    assert jnp.allclose(sh2, sh_ref, rtol=1e-2, atol=1e-2)

    # 3) default bf16 MXU path, automatic tile selection.
    y3, sh3 = res_ar_module_forward(x, params, kwidth=kwidth, dilation=dilation)
    jax.block_until_ready((y3, sh3))
    assert jnp.allclose(y3, y_ref, rtol=3e-2, atol=3e-2)
    assert jnp.allclose(sh3, sh_ref, rtol=3e-2, atol=3e-2)

    print("KERNEL_OK")
</pallas_src>

<mosaic_0001>
module attributes {stable_mosaic.version = 11 : i64} {
  func.func @_res_ar_kernel(%arg0: i32, %arg1: i32, %arg2: memref<1x8x128xf32, #tpu.memory_space<vmem>>, %arg3: memref<1x8x128xf32, #tpu.memory_space<vmem>>, %arg4: memref<384x128xf32, #tpu.memory_space<vmem>>, %arg5: memref<1x128xf32, #tpu.memory_space<vmem>>, %arg6: memref<1x128xf32, #tpu.memory_space<vmem>>, %arg7: memref<128x256xf32, #tpu.memory_space<vmem>>, %arg8: memref<1x256xf32, #tpu.memory_space<vmem>>, %arg9: memref<1x8x128xf32, #tpu.memory_space<vmem>>, %arg10: memref<1x8x128xf32, #tpu.memory_space<vmem>>) attributes {dimension_semantics = [#tpu.dimension_semantics<parallel>, #tpu.dimension_semantics<parallel>], iteration_bounds = array<i64: 2, 2>, scalar_prefetch = 0 : i64, scratch_operands = 0 : i64, tpu.core_type = #tpu.core_type<tc>, window_params = [{transform_indices = @transform_0, window_bounds = array<i64: 1, 8, 128>}, {transform_indices = @transform_1, window_bounds = array<i64: 1, 8, 128>}, {pipeline_mode = #tpu.pipeline_mode<synchronous>, transform_indices = @transform_2, window_bounds = array<i64: 384, 128>}, {pipeline_mode = #tpu.pipeline_mode<synchronous>, transform_indices = @transform_3, window_bounds = array<i64: 1, 128>}, {pipeline_mode = #tpu.pipeline_mode<synchronous>, transform_indices = @transform_4, window_bounds = array<i64: 1, 128>}, {pipeline_mode = #tpu.pipeline_mode<synchronous>, transform_indices = @transform_5, window_bounds = array<i64: 128, 256>}, {pipeline_mode = #tpu.pipeline_mode<synchronous>, transform_indices = @transform_6, window_bounds = array<i64: 1, 256>}, {transform_indices = @transform_7, window_bounds = array<i64: 1, 8, 128>}, {transform_indices = @transform_8, window_bounds = array<i64: 1, 8, 128>}]} {
    %c0 = arith.constant 0 : index
    %c0_0 = arith.constant 0 : index
    %c0_1 = arith.constant 0 : index
    %0 = vector.load %arg3[%c0, %c0_0, %c0_1] : memref<1x8x128xf32, #tpu.memory_space<vmem>>, vector<1x8x128xf32>
    %1 = vector.shape_cast %0 : vector<1x8x128xf32> to vector<8x128xf32>
    %c0_2 = arith.constant 0 : index
    %c4 = arith.constant 4 : index
    %c0_3 = arith.constant 0 : index
    %2 = vector.load %arg2[%c0_2, %c4, %c0_3] : memref<1x8x128xf32, #tpu.memory_space<vmem>>, vector<1x4x128xf32>
    %3 = vector.shape_cast %2 : vector<1x4x128xf32> to vector<4x128xf32>
    %c0_i32 = arith.constant 0 : i32
    %4 = arith.cmpi sgt, %arg1, %c0_i32 : i32
    %cst = arith.constant 0.000000e+00 : f32
    %5 = vector.broadcast %cst : f32 to vector<4x128xf32>
    %6 = arith.select %4, %3, %5 : vector<4x128xf32>
    %7 = vector.extract_strided_slice %1 {offsets = [0, 0], sizes = [4, 128], strides = [1, 1]} : vector<8x128xf32> to vector<4x128xf32>
    %8 = tpu.concatenate %6, %7 in 0 : vector<4x128xf32>, vector<4x128xf32> -> vector<8x128xf32>
    %9 = vector.extract_strided_slice %6 {offsets = [2, 0], sizes = [2, 128], strides = [1, 1]} : vector<4x128xf32> to vector<2x128xf32>
    %10 = vector.extract_strided_slice %1 {offsets = [0, 0], sizes = [6, 128], strides = [1, 1]} : vector<8x128xf32> to vector<6x128xf32>
    %11 = tpu.concatenate %9, %10 in 0 : vector<2x128xf32>, vector<6x128xf32> -> vector<8x128xf32>
    %12 = tpu.concatenate %8, %11, %1 in 1 : vector<8x128xf32>, vector<8x128xf32>, vector<8x128xf32> -> vector<8x384xf32>
    %c0_4 = arith.constant 0 : index
    %c0_5 = arith.constant 0 : index
    %13 = vector.load %arg4[%c0_4, %c0_5] : memref<384x128xf32, #tpu.memory_space<vmem>>, vector<384x128xf32>
    %cst_6 = arith.constant dense<0.000000e+00> : vector<8x128xf32>
    %14 = tpu.matmul %12, %13, %cst_6 {dimension_numbers = #tpu.dot_dimension_numbers<[1], [0], [0], [1], [0, 0, 1, 1], [], []>} : vector<8x384xf32>, vector<384x128xf32>, vector<8x128xf32> -> vector<8x128xf32>
    %c0_7 = arith.constant 0 : index
    %c0_8 = arith.constant 0 : index
    %15 = vector.load %arg5[%c0_7, %c0_8] : memref<1x128xf32, #tpu.memory_space<vmem>>, vector<1x128xf32>
    %16 = vector.broadcast %15 : vector<1x128xf32> to vector<8x128xf32>
    %17 = arith.addf %14, %16 : vector<8x128xf32>
    %cst_9 = arith.constant 0.000000e+00 : f32
    %18 = vector.broadcast %cst_9 : f32 to vector<8x128xf32>
    %19 = arith.cmpf ogt, %17, %18 : vector<8x128xf32>
    %c0_10 = arith.constant 0 : index
    %c0_11 = arith.constant 0 : index
    %20 = vector.load %arg6[%c0_10, %c0_11] : memref<1x128xf32, #tpu.memory_space<vmem>>, vector<1x128xf32>
    %21 = vector.broadcast %20 : vector<1x128xf32> to vector<8x128xf32>
    %22 = arith.mulf %21, %17 : vector<8x128xf32>
    %23 = arith.select %19, %17, %22 : vector<8x128xi1>, vector<8x128xf32>
    %c0_12 = arith.constant 0 : index
    %c0_13 = arith.constant 0 : index
    %24 = vector.load %arg7[%c0_12, %c0_13] : memref<128x256xf32, #tpu.memory_space<vmem>>, vector<128x256xf32>
    %cst_14 = arith.constant dense<0.000000e+00> : vector<8x256xf32>
    %25 = tpu.matmul %23, %24, %cst_14 {dimension_numbers = #tpu.dot_dimension_numbers<[1], [0], [0], [1], [0, 0, 1, 1], [], []>} : vector<8x128xf32>, vector<128x256xf32>, vector<8x256xf32> -> vector<8x256xf32>
    %c0_15 = arith.constant 0 : index
    %c0_16 = arith.constant 0 : index
    %26 = vector.load %arg8[%c0_15, %c0_16] : memref<1x256xf32, #tpu.memory_space<vmem>>, vector<1x256xf32>
    %27 = vector.broadcast %26 : vector<1x256xf32> to vector<8x256xf32>
    %28 = arith.addf %25, %27 : vector<8x256xf32>
    %29 = vector.extract_strided_slice %28 {offsets = [0, 0], sizes = [8, 128], strides = [1, 1]} : vector<8x256xf32> to vector<8x128xf32>
    %30 = arith.addf %1, %29 : vector<8x128xf32>
    %c0_17 = arith.constant 0 : index
    %c0_18 = arith.constant 0 : index
    %c0_19 = arith.constant 0 : index
    %31 = vector.load %arg9[%c0_17, %c0_18, %c0_19] : memref<1x8x128xf32, #tpu.memory_space<vmem>>, vector<1x8x128xf32>
    %32 = vector.shape_cast %31 : vector<1x8x128xf32> to vector<8x128xf32>
    %33 = vector.shape_cast %30 : vector<8x128xf32> to vector<1x8x128xf32>
    tpu.vector_store %arg9[%c0_17, %c0_18, %c0_19], %33 {strides = array<i32>} : memref<1x8x128xf32, #tpu.memory_space<vmem>>, vector<1x8x128xf32>,
    %34 = vector.extract_strided_slice %28 {offsets = [0, 128], sizes = [8, 128], strides = [1, 1]} : vector<8x256xf32> to vector<8x128xf32>
    %c0_20 = arith.constant 0 : index
    %c0_21 = arith.constant 0 : index
    %c0_22 = arith.constant 0 : index
    %35 = vector.load %arg10[%c0_20, %c0_21, %c0_22] : memref<1x8x128xf32, #tpu.memory_space<vmem>>, vector<1x8x128xf32>
    %36 = vector.shape_cast %35 : vector<1x8x128xf32> to vector<8x128xf32>
    %37 = vector.shape_cast %34 : vector<8x128xf32> to vector<1x8x128xf32>
    tpu.vector_store %arg10[%c0_20, %c0_21, %c0_22], %37 {strides = array<i32>} : memref<1x8x128xf32, #tpu.memory_space<vmem>>, vector<1x8x128xf32>,
    return
  }
  func.func @transform_0(%arg0: i32, %arg1: i32) -> (i32, i32, i32) {
    %c1_i32 = arith.constant 1 : i32
    %0 = arith.muli %arg1, %c1_i32 : i32
    %c1_i32_0 = arith.constant 1 : i32
    %1 = arith.subi %0, %c1_i32_0 : i32
    %c0_i32 = arith.constant 0 : i32
    %2 = arith.maxsi %1, %c0_i32 : i32
    %c0_i32_1 = arith.constant 0 : i32
    %c0_i32_2 = arith.constant 0 : i32
    return %arg0, %2, %c0_i32_1 : i32, i32, i32
  }
  func.func @transform_1(%arg0: i32, %arg1: i32) -> (i32, i32, i32) {
    %c0_i32 = arith.constant 0 : i32
    %c0_i32_0 = arith.constant 0 : i32
    return %arg0, %arg1, %c0_i32 : i32, i32, i32
  }
  func.func @transform_2(%arg0: i32, %arg1: i32) -> (i32, i32) {
    %c0_i32 = arith.constant 0 : i32
    %c0_i32_0 = arith.constant 0 : i32
    %c0_i32_1 = arith.constant 0 : i32
    return %c0_i32, %c0_i32_0 : i32, i32
  }
  func.func @transform_3(%arg0: i32, %arg1: i32) -> (i32, i32) {
    %c0_i32 = arith.constant 0 : i32
    %c0_i32_0 = arith.constant 0 : i32
    %c0_i32_1 = arith.constant 0 : i32
    return %c0_i32, %c0_i32_0 : i32, i32
  }
  func.func @transform_4(%arg0: i32, %arg1: i32) -> (i32, i32) {
    %c0_i32 = arith.constant 0 : i32
    %c0_i32_0 = arith.constant 0 : i32
    %c0_i32_1 = arith.constant 0 : i32
    return %c0_i32, %c0_i32_0 : i32, i32
  }
  func.func @transform_5(%arg0: i32, %arg1: i32) -> (i32, i32) {
    %c0_i32 = arith.constant 0 : i32
    %c0_i32_0 = arith.constant 0 : i32
    %c0_i32_1 = arith.constant 0 : i32
    return %c0_i32, %c0_i32_0 : i32, i32
  }
  func.func @transform_6(%arg0: i32, %arg1: i32) -> (i32, i32) {
    %c0_i32 = arith.constant 0 : i32
    %c0_i32_0 = arith.constant 0 : i32
    %c0_i32_1 = arith.constant 0 : i32
    return %c0_i32, %c0_i32_0 : i32, i32
  }
  func.func @transform_7(%arg0: i32, %arg1: i32) -> (i32, i32, i32) {
    %c0_i32 = arith.constant 0 : i32
    %c0_i32_0 = arith.constant 0 : i32
    return %arg0, %arg1, %c0_i32 : i32, i32, i32
  }
  func.func @transform_8(%arg0: i32, %arg1: i32) -> (i32, i32, i32) {
    %c0_i32 = arith.constant 0 : i32
    %c0_i32_0 = arith.constant 0 : i32
    return %arg0, %arg1, %c0_i32 : i32, i32, i32
  }
}

</mosaic_0001>

<llo_original>
// kernel: tpu_custom_call.1
$region0: #{tpu_custom_call.1}
  #allocation0 [shape = 'u32[]', space=smem, size = 0x4, offset = 0x4, fixed_abs, tag = 'smem constant byte address 0x4 - core index']
  #allocation1 [shape = 'u32[144,128]{1,0:T(1,128)}', space=vmem, size = 0x12000, scoped, tag = 'internal scratch']
  %s0 = inlined_call_operand.hbm [shape: f32[2,16,128], index: 0, kind: input, shape index: {}]
  %s1 = inlined_call_operand.hbm [shape: f32[2,16,128], index: 1, kind: input, shape index: {}]
  %s2 = inlined_call_operand.hbm [shape: f32[384,128], index: 2, kind: input, shape index: {}]
  %s3 = inlined_call_operand.hbm [shape: f32[1,128], index: 3, kind: input, shape index: {}]
  %s4 = inlined_call_operand.hbm [shape: f32[1,128], index: 4, kind: input, shape index: {}]
  %s5 = inlined_call_operand.hbm [shape: f32[128,256], index: 5, kind: input, shape index: {}]
  %s6 = inlined_call_operand.hbm [shape: f32[1,256], index: 6, kind: input, shape index: {}]
  %s7 = inlined_call_operand.hbm [shape: f32[2,16,128], index: 7, kind: output, shape index: {0}]
  %s8 = inlined_call_operand.hbm [shape: f32[2,16,128], index: 8, kind: output, shape index: {1}]
  %9 = xla_tuple %s7, %s8
  %s10 = sld [smem:[#allocation0]]
  $region97: #{tpu_custom_call.1} parent=0
    _
  %s12 = ssub.s32 1, %s10
  %s13 = scalar_select 0, %s12, %s10
  $region1: #{tpu_custom_call.1} parent=0
    #allocation2 [shape = 'u8[8192]{0}', space=vmem, size = 0x2000, scoped, tag = 'input window, operand 0']
    #allocation3 [shape = 's32[2]{0}', space=sflag, size = 0x8, scoped, tag = 'scoped memory for tpu_custom_call.1']
    #allocation4 [shape = 's32[2]{0}', space=sflag, size = 0x8, scoped, tag = 'scoped memory for tpu_custom_call.1']
    #allocation5 [shape = 'u8[8192]{0}', space=vmem, size = 0x2000, scoped, tag = 'input window, operand 1']
    #allocation6 [shape = 's32[2]{0}', space=sflag, size = 0x8, scoped, tag = 'scoped memory for tpu_custom_call.1']
    #allocation7 [shape = 'u8[196608]{0}', space=vmem, size = 0x30000, scoped, tag = 'input window, operand 2, single buffered']
    #allocation8 [shape = 'u8[512]{0}', space=vmem, size = 0x400, scoped, tag = 'input window, operand 3, single buffered']
    #allocation9 [shape = 's32[1]{0}', space=sflag, size = 0x4, scoped, tag = 'scoped memory for tpu_custom_call.1']
    #allocation10 [shape = 'u8[512]{0}', space=vmem, size = 0x400, scoped, tag = 'input window, operand 4, single buffered']
    #allocation11 [shape = 'u8[131072]{0}', space=vmem, size = 0x20000, scoped, tag = 'input window, operand 5, single buffered']
    #allocation12 [shape = 's32[1]{0}', space=sflag, size = 0x4, scoped, tag = 'scoped memory for tpu_custom_call.1']
    #allocation13 [shape = 'u8[1024]{0}', space=vmem, size = 0x400, scoped, tag = 'input window, operand 6, single buffered']
    #allocation14 [shape = 'u8[8192]{0}', space=vmem, size = 0x2000, scoped, tag = 'output window, operand 0']
    #allocation15 [shape = 'u8[8192]{0}', space=vmem, size = 0x2000, scoped, tag = 'output window, operand 1']
    #allocation16 [shape = 's32[2]{0}', space=sflag, size = 0x8, scoped, tag = 'scoped memory for tpu_custom_call.1']
    %14 = vsyncpa [#allocation3], 0
    %s15 = scalar_lea.sflag [#allocation3], 1
    %16 = vsyncpa %s15, 0
    %17 = vsyncpa [#allocation6], 0
    %s18 = scalar_lea.sflag [#allocation6], 1
    %19 = vsyncpa %s18, 0
    %20 = vsyncpa [#allocation9], 0
    %21 = vsyncpa [#allocation12], 0
    %22 = vsyncpa [#allocation4], 0
    %s23 = scalar_lea.sflag [#allocation4], 1
    %24 = vsyncpa %s23, 0
    %25 = vsyncpa [#allocation16], 0
    %s26 = scalar_lea.sflag [#allocation16], 1
    %27 = vsyncpa %s26, 0
    loop: start=0, step=1, limit=6
    $region2: #{tpu_custom_call.1} parent=1 // loop_pre_header
      _
    $region3: #{tpu_custom_call.1} parent=1 // loop_header
      %s29 = sphi 0, %s33
      %p30 = scmp.ge.s32.totalorder %s29, 6
      %s36 = sphi 0, %s48
      %s37 = sphi 0, %s44
      %s38 = sphi 0, %s36
      %s39 = sphi 0, %s37
      %s40 = sphi 0, %s38
      %s41 = sphi 0, %s39
      %s59 = sphi 0, %s61
      %s62 = sphi 0, %s59
      %s63 = sphi 0, %s62
      %s79 = sphi 0, %s63
      %s87 = sphi 0, %s89
      %s90 = sphi 0, %s87
      %s91 = sphi 0, %s90
      %s107 = sphi 0, %s91
      %s111 = sphi 0, %s111
      %s113 = sphi 0, %s111
      %s114 = sphi 0, %s113
      %s128 = sphi 0, %s114
      %s132 = sphi 0, %s132
      %s134 = sphi 0, %s132
      %s135 = sphi 0, %s134
      %s149 = sphi 0, %s135
      %s153 = sphi 0, %s153
      %s155 = sphi 0, %s153
      %s156 = sphi 0, %s155
      %s170 = sphi 0, %s156
      %s174 = sphi 0, %s174
      %s176 = sphi 0, %s174
      %s177 = sphi 0, %s176
      %s191 = sphi 0, %s177
      %s195 = sphi 0, %s195
      %s197 = sphi 0, %s195
      %s198 = sphi 0, %s197
      %s212 = sphi 0, %s198
      %s220 = sphi 0, %s222
      %s223 = sphi 0, %s220
      %s224 = sphi 0, %s223
      %s240 = sphi 0, %s224
      %s248 = sphi 0, %s250
      %s251 = sphi 0, %s248
      %s252 = sphi 0, %s251
      %s268 = sphi 0, %s252
    $region4: #{tpu_custom_call.1} parent=1 // loop_header_branch
      %32 = sbr.rel (%p30) target = $region8
    $region5: #{tpu_custom_call.1} parent=1 // loop_body
      %s34 = ssub.s32 %s29, 1
      %s35 = ssub.s32 %s29, 2
      %s42 = sadd.s32 1, %s37
      %p43 = scmp.ge.s32.totalorder %s42, 2
      %s44 = scalar_select %p43, 0, %s42
      %s45 = sadd.s32 1, %s36
      %s46 = scalar_select %p43, %s45, %s36
      %p47 = scmp.ge.s32.totalorder %s46, 2
      %s48 = scalar_select %p47, 0, %s46
      %s49 = ssub.s32 %s37, 1
      %p50 = scmp.gt.s32.totalorder %s49, 0
      %s51 = scalar_select %p50, %s49, 0
      %s52 = ssub.s32 %s44, 1
      %p53 = scmp.gt.s32.totalorder %s52, 0
      %s54 = scalar_select %p53, %s52, 0
      %s55 = ssub.s32 %s36, %s48
      %s56 = ssub.s32 %s51, %s54
      %s57 = sor.u32 %s55, %s56
      %p58 = scmp.eq.s32.totalorder %s57, 0
      %s60 = sadd.s32 %s59, 1
      %s61 = scalar_select %p58, %s59, %s60
      %p64 = pneg %p58
      %p65 = scmp.eq.s32.totalorder %s29, 3
      %p66 = por %p64, %p65
      %p67 = scmp.ne.s32.totalorder %s59, %s62
      %p68 = scmp.eq.s32.totalorder %s29, 0
      %p69 = por %p67, %p68
      %p70 = scmp.ne.s32.totalorder %s59, %s62
      %p71 = scmp.eq.s32.totalorder %s34, 3
      %p72 = por %p70, %p71
      %p73 = scmp.ne.s32.totalorder %s62, %s63
      %p74 = scmp.eq.s32.totalorder %s34, 0
      %p75 = por %p73, %p74
      %p76 = scmp.ne.s32.totalorder %s62, %s63
      %p77 = scmp.eq.s32.totalorder %s35, 3
      %p78 = por %p76, %p77
      %p80 = scmp.ne.s32.totalorder %s63, %s79
      %p81 = scmp.eq.s32.totalorder %s35, 0
      %p82 = por %p80, %p81
      %s83 = ssub.s32 %s36, %s48
      %s84 = ssub.s32 %s37, %s44
      %s85 = sor.u32 %s83, %s84
      %p86 = scmp.eq.s32.totalorder %s85, 0
      %s88 = sadd.s32 %s87, 1
      %s89 = scalar_select %p86, %s87, %s88
      %p92 = pneg %p86
      %p93 = scmp.eq.s32.totalorder %s29, 3
      %p94 = por %p92, %p93
      %p95 = scmp.ne.s32.totalorder %s87, %s90
      %p96 = scmp.eq.s32.totalorder %s29, 0
      %p97 = por %p95, %p96
      %p98 = scmp.ne.s32.totalorder %s87, %s90
      %p99 = scmp.eq.s32.totalorder %s34, 3
      %p100 = por %p98, %p99
      %p101 = scmp.ne.s32.totalorder %s90, %s91
      %p102 = scmp.eq.s32.totalorder %s34, 0
      %p103 = por %p101, %p102
      %p104 = scmp.ne.s32.totalorder %s90, %s91
      %p105 = scmp.eq.s32.totalorder %s35, 3
      %p106 = por %p104, %p105
      %p108 = scmp.ne.s32.totalorder %s91, %s107
      %p109 = scmp.eq.s32.totalorder %s35, 0
      %p110 = por %p108, %p109
      %s112 = sadd.s32 %s111, 1
      %p115 = scmp.eq.s32.totalorder %s29, 3
      %p116 = scmp.ne.s32.totalorder %s111, %s113
      %p117 = scmp.eq.s32.totalorder %s29, 0
      %p118 = por %p116, %p117
      %p119 = scmp.ne.s32.totalorder %s111, %s113
      %p120 = scmp.eq.s32.totalorder %s34, 3
      %p121 = por %p119, %p120
      %p122 = scmp.ne.s32.totalorder %s113, %s114
      %p123 = scmp.eq.s32.totalorder %s34, 0
      %p124 = por %p122, %p123
      %p125 = scmp.ne.s32.totalorder %s113, %s114
      %p126 = scmp.eq.s32.totalorder %s35, 3
      %p127 = por %p125, %p126
      %p129 = scmp.ne.s32.totalorder %s114, %s128
      %p130 = scmp.eq.s32.totalorder %s35, 0
      %p131 = por %p129, %p130
      %s133 = sadd.s32 %s132, 1
      %p136 = scmp.eq.s32.totalorder %s29, 3
      %p137 = scmp.ne.s32.totalorder %s132, %s134
      %p138 = scmp.eq.s32.totalorder %s29, 0
      %p139 = por %p137, %p138
      %p140 = scmp.ne.s32.totalorder %s132, %s134
      %p141 = scmp.eq.s32.totalorder %s34, 3
      %p142 = por %p140, %p141
      %p143 = scmp.ne.s32.totalorder %s134, %s135
      %p144 = scmp.eq.s32.totalorder %s34, 0
      %p145 = por %p143, %p144
      %p146 = scmp.ne.s32.totalorder %s134, %s135
      %p147 = scmp.eq.s32.totalorder %s35, 3
      %p148 = por %p146, %p147
      %p150 = scmp.ne.s32.totalorder %s135, %s149
      %p151 = scmp.eq.s32.totalorder %s35, 0
      %p152 = por %p150, %p151
      %s154 = sadd.s32 %s153, 1
      %p157 = scmp.eq.s32.totalorder %s29, 3
      %p158 = scmp.ne.s32.totalorder %s153, %s155
      %p159 = scmp.eq.s32.totalorder %s29, 0
      %p160 = por %p158, %p159
      %p161 = scmp.ne.s32.totalorder %s153, %s155
      %p162 = scmp.eq.s32.totalorder %s34, 3
      %p163 = por %p161, %p162
      %p164 = scmp.ne.s32.totalorder %s155, %s156
      %p165 = scmp.eq.s32.totalorder %s34, 0
      %p166 = por %p164, %p165
      %p167 = scmp.ne.s32.totalorder %s155, %s156
      %p168 = scmp.eq.s32.totalorder %s35, 3
      %p169 = por %p167, %p168
      %p171 = scmp.ne.s32.totalorder %s156, %s170
      %p172 = scmp.eq.s32.totalorder %s35, 0
      %p173 = por %p171, %p172
      %s175 = sadd.s32 %s174, 1
      %p178 = scmp.eq.s32.totalorder %s29, 3
      %p179 = scmp.ne.s32.totalorder %s174, %s176
      %p180 = scmp.eq.s32.totalorder %s29, 0
      %p181 = por %p179, %p180
      %p182 = scmp.ne.s32.totalorder %s174, %s176
      %p183 = scmp.eq.s32.totalorder %s34, 3
      %p184 = por %p182, %p183
      %p185 = scmp.ne.s32.totalorder %s176, %s177
      %p186 = scmp.eq.s32.totalorder %s34, 0
      %p187 = por %p185, %p186
      %p188 = scmp.ne.s32.totalorder %s176, %s177
      %p189 = scmp.eq.s32.totalorder %s35, 3
      %p190 = por %p188, %p189
      %p192 = scmp.ne.s32.totalorder %s177, %s191
      %p193 = scmp.eq.s32.totalorder %s35, 0
      %p194 = por %p192, %p193
      %s196 = sadd.s32 %s195, 1
      %p199 = scmp.eq.s32.totalorder %s29, 3
      %p200 = scmp.ne.s32.totalorder %s195, %s197
      %p201 = scmp.eq.s32.totalorder %s29, 0
      %p202 = por %p200, %p201
      %p203 = scmp.ne.s32.totalorder %s195, %s197
      %p204 = scmp.eq.s32.totalorder %s34, 3
      %p205 = por %p203, %p204
      %p206 = scmp.ne.s32.totalorder %s197, %s198
      %p207 = scmp.eq.s32.totalorder %s34, 0
      %p208 = por %p206, %p207
      %p209 = scmp.ne.s32.totalorder %s197, %s198
      %p210 = scmp.eq.s32.totalorder %s35, 3
      %p211 = por %p209, %p210
      %p213 = scmp.ne.s32.totalorder %s198, %s212
      %p214 = scmp.eq.s32.totalorder %s35, 0
      %p215 = por %p213, %p214
      %s216 = ssub.s32 %s36, %s48
      %s217 = ssub.s32 %s37, %s44
      %s218 = sor.u32 %s216, %s217
      %p219 = scmp.eq.s32.totalorder %s218, 0
      %s221 = sadd.s32 %s220, 1
      %s222 = scalar_select %p219, %s220, %s221
      %p225 = pneg %p219
      %p226 = scmp.eq.s32.totalorder %s29, 3
      %p227 = por %p225, %p226
      %p228 = scmp.ne.s32.totalorder %s220, %s223
      %p229 = scmp.eq.s32.totalorder %s29, 0
      %p230 = por %p228, %p229
      %p231 = scmp.ne.s32.totalorder %s220, %s223
      %p232 = scmp.eq.s32.totalorder %s34, 3
      %p233 = por %p231, %p232
      %p234 = scmp.ne.s32.totalorder %s223, %s224
      %p235 = scmp.eq.s32.totalorder %s34, 0
      %p236 = por %p234, %p235
      %p237 = scmp.ne.s32.totalorder %s223, %s224
      %p238 = scmp.eq.s32.totalorder %s35, 3
      %p239 = por %p237, %p238
      %p241 = scmp.ne.s32.totalorder %s224, %s240
      %p242 = scmp.eq.s32.totalorder %s35, 0
      %p243 = por %p241, %p242
      %s244 = ssub.s32 %s36, %s48
      %s245 = ssub.s32 %s37, %s44
      %s246 = sor.u32 %s244, %s245
      %p247 = scmp.eq.s32.totalorder %s246, 0
      %s249 = sadd.s32 %s248, 1
      %s250 = scalar_select %p247, %s248, %s249
      %p253 = pneg %p247
      %p254 = scmp.eq.s32.totalorder %s29, 3
      %p255 = por %p253, %p254
      %p256 = scmp.ne.s32.totalorder %s248, %s251
      %p257 = scmp.eq.s32.totalorder %s29, 0
      %p258 = por %p256, %p257
      %p259 = scmp.ne.s32.totalorder %s248, %s251
      %p260 = scmp.eq.s32.totalorder %s34, 3
      %p261 = por %p259, %p260
      %p262 = scmp.ne.s32.totalorder %s251, %s252
      %p263 = scmp.eq.s32.totalorder %s34, 0
      %p264 = por %p262, %p263
      %p265 = scmp.ne.s32.totalorder %s251, %s252
      %p266 = scmp.eq.s32.totalorder %s35, 3
      %p267 = por %p265, %p266
      %p269 = scmp.ne.s32.totalorder %s252, %s268
      %p270 = scmp.eq.s32.totalorder %s35, 0
      %p271 = por %p269, %p270
      %p272 = scmp.le.s32.totalorder 1, %s29
      %p273 = scmp.lt.s32.totalorder %s29, 5
      %p274 = pnand %p272, %p273
      %p275 = pneg %p274
      // Predicated region
      $region9: #{tpu_custom_call.1} parent=5 // pred_check
        _
      $region10: #{tpu_custom_call.1} parent=5 // pred_check_branch
        %277 = sbr.rel (%p274) target = $region12
      $region11: #{tpu_custom_call.1} parent=5 // pred_region
        %s278 = ssub.s32 %s29, 1
        // Predicated region
        $region13: #{tpu_custom_call.1} parent=11 // pred_check
          %p279 = pneg %p124
        $region14: #{tpu_custom_call.1} parent=11 // pred_check_branch
          %281 = sbr.rel (%p279) target = $region16
        $region15: #{tpu_custom_call.1} parent=11 // pred_region
          %s283 = ssub.s32 6144, 6144
          %284 = vsyncadd [#allocation6], %s283
          %s285 = sshll.u32 [#allocation7], 4
          %s286 = int_to_ptr.vmem [resolvable:$true] %s285
          %291 = dma.hbm_to_vmem [thread:$0]  %s2, 6144, %s286, [#allocation6], 128, 128, 8
        $region16: #{tpu_custom_call.1} parent=11 // pred_fallthru
          _
        // Predicated region
        $region17: #{tpu_custom_call.1} parent=11 // pred_check
          %p292 = pneg %p145
        $region18: #{tpu_custom_call.1} parent=11 // pred_check_branch
          %294 = sbr.rel (%p292) target = $region20
        $region19: #{tpu_custom_call.1} parent=11 // pred_region
          %s296 = ssub.s32 16, 16
          %297 = vsyncadd [#allocation9], %s296
          %s299 = sshll.u32 [#allocation8], 4
          %s300 = int_to_ptr.vmem [resolvable:$true] %s299
          %302 = dma.hbm_to_vmem [thread:$0]  %s3, 16, %s300, [#allocation9]
        $region20: #{tpu_custom_call.1} parent=11 // pred_fallthru
          _
        // Predicated region
        $region21: #{tpu_custom_call.1} parent=11 // pred_check
          %p303 = pneg %p166
        $region22: #{tpu_custom_call.1} parent=11 // pred_check_branch
          %305 = sbr.rel (%p303) target = $region24
        $region23: #{tpu_custom_call.1} parent=11 // pred_region
          %s307 = ssub.s32 16, 16
          %308 = vsyncadd [#allocation9], %s307
          %s310 = sshll.u32 [#allocation10], 4
          %s311 = int_to_ptr.vmem [resolvable:$true] %s310
          %313 = dma.hbm_to_vmem [thread:$0]  %s4, 16, %s311, [#allocation9]
        $region24: #{tpu_custom_call.1} parent=11 // pred_fallthru
          _
        // Predicated region
        $region25: #{tpu_custom_call.1} parent=11 // pred_check
          %p314 = pneg %p187
        $region26: #{tpu_custom_call.1} parent=11 // pred_check_branch
          %316 = sbr.rel (%p314) target = $region28
        $region27: #{tpu_custom_call.1} parent=11 // pred_region
          %s318 = ssub.s32 4096, 4096
          %319 = vsyncadd [#allocation12], %s318
          %s320 = sshll.u32 [#allocation11], 4
          %s321 = int_to_ptr.vmem [resolvable:$true] %s320
          %326 = dma.hbm_to_vmem [thread:$0]  %s5, 4096, %s321, [#allocation12], 256, 256, 16
        $region28: #{tpu_custom_call.1} parent=11 // pred_fallthru
          _
        // Predicated region
        $region29: #{tpu_custom_call.1} parent=11 // pred_check
          %p327 = pneg %p208
        $region30: #{tpu_custom_call.1} parent=11 // pred_check_branch
          %329 = sbr.rel (%p327) target = $region32
        $region31: #{tpu_custom_call.1} parent=11 // pred_region
          %s331 = ssub.s32 32, 32
          %332 = vsyncadd [#allocation12], %s331
          %s334 = sshll.u32 [#allocation13], 4
          %s335 = int_to_ptr.vmem [resolvable:$true] %s334
          %337 = dma.hbm_to_vmem [thread:$0]  %s6, 32, %s335, [#allocation12]
        $region32: #{tpu_custom_call.1} parent=11 // pred_fallthru
          _
      $region12: #{tpu_custom_call.1} parent=5 // pred_fallthru
        _
      %p338 = scmp.lt.s32.totalorder %s29, 4
      // Predicated region
      $region33: #{tpu_custom_call.1} parent=5 // pred_check
        %p339 = pneg %p338
      $region34: #{tpu_custom_call.1} parent=5 // pred_check_branch
        %341 = sbr.rel (%p339) target = $region36
      $region35: #{tpu_custom_call.1} parent=5 // pred_region
        // Predicated region
        $region37: #{tpu_custom_call.1} parent=35 // pred_check
          %p342 = pneg %p69
        $region38: #{tpu_custom_call.1} parent=35 // pred_check_branch
          %344 = sbr.rel (%p342) target = $region40
        $region39: #{tpu_custom_call.1} parent=35 // pred_region
          %s345 = sand.u32 %s59, 1
          %s346 = scalar_lea.sflag [#allocation3], %s345
          %s347 = sand.u32 %s59, 1
          %s348 = smul.addr %s347, 8
          %s349 = scalar_lea.vmem [#allocation2], %s348
          %s350 = ssub.s32 %s37, 1
          %p351 = scmp.gt.s32.totalorder %s350, 0
          %s352 = scalar_select %p351, %s350, 0
          %s354 = ssub.s32 128, 128
          %355 = vsyncadd %s346, %s354
          %s356 = smul.addr %s36, 2
          %s357 = sadd.s32 %s352, %s356
          %s358 = smul.addr %s357, 128
          %s359 = scalar_lea.hbm %s0, %s358
          %s361 = sshll.u32 %s349, 4
          %s362 = int_to_ptr.vmem [resolvable:$true] %s361
          %364 = dma.hbm_to_vmem [thread:$0]  %s359, 128, %s362, %s346
        $region40: #{tpu_custom_call.1} parent=35 // pred_fallthru
          _
        // Predicated region
        $region41: #{tpu_custom_call.1} parent=35 // pred_check
          %p365 = pneg %p97
        $region42: #{tpu_custom_call.1} parent=35 // pred_check_branch
          %367 = sbr.rel (%p365) target = $region44
        $region43: #{tpu_custom_call.1} parent=35 // pred_region
          %s368 = sand.u32 %s29, 1
          %s369 = scalar_lea.sflag [#allocation6], %s368
          %s370 = sand.u32 %s87, 1
          %s371 = smul.addr %s370, 8
          %s372 = scalar_lea.vmem [#allocation5], %s371
          %s374 = ssub.s32 128, 128
          %375 = vsyncadd %s369, %s374
          %s376 = smul.addr %s36, 2
          %s377 = sadd.s32 %s37, %s376
          %s378 = smul.addr %s377, 128
          %s379 = scalar_lea.hbm %s1, %s378
          %s381 = sshll.u32 %s372, 4
          %s382 = int_to_ptr.vmem [resolvable:$true] %s381
          %384 = dma.hbm_to_vmem [thread:$0]  %s379, 128, %s382, %s369
        $region44: #{tpu_custom_call.1} parent=35 // pred_fallthru
          _
      $region36: #{tpu_custom_call.1} parent=5 // pred_fallthru
        _
      %p385 = scmp.le.s32.totalorder 1, %s29
      %p386 = scmp.lt.s32.totalorder %s29, 5
      %p387 = pnand %p385, %p386
      %p388 = pneg %p387
      // Predicated region
      $region45: #{tpu_custom_call.1} parent=5 // pred_check
        _
      $region46: #{tpu_custom_call.1} parent=5 // pred_check_branch
        %390 = sbr.rel (%p387) target = $region48
      $region47: #{tpu_custom_call.1} parent=5 // pred_region
        %s391 = ssub.s32 %s29, 1
        %s392 = sand.u32 %s62, 1
        %s393 = scalar_lea.sflag [#allocation3], %s392
        %s394 = sand.u32 %s62, 1
        %s395 = smul.addr %s394, 8
        %s396 = scalar_lea.vmem [#allocation2], %s395
        // Predicated region
        $region49: #{tpu_custom_call.1} parent=47 // pred_check
          %p397 = pneg %p75
        $region50: #{tpu_custom_call.1} parent=47 // pred_check_branch
          %399 = sbr.rel (%p397) target = $region52
        $region51: #{tpu_custom_call.1} parent=47 // pred_region
          %400 = dma.done %s393, 128
        $region52: #{tpu_custom_call.1} parent=47 // pred_fallthru
          _
        %s401 = sand.u32 %s34, 1
        %s402 = scalar_lea.sflag [#allocation6], %s401
        %s403 = sand.u32 %s90, 1
        %s404 = smul.addr %s403, 8
        %s405 = scalar_lea.vmem [#allocation5], %s404
        // Predicated region
        $region53: #{tpu_custom_call.1} parent=47 // pred_check
          %p406 = pneg %p103
        $region54: #{tpu_custom_call.1} parent=47 // pred_check_branch
          %408 = sbr.rel (%p406) target = $region56
        $region55: #{tpu_custom_call.1} parent=47 // pred_region
          %409 = dma.done %s402, 128
        $region56: #{tpu_custom_call.1} parent=47 // pred_fallthru
          _
        // Predicated region
        $region57: #{tpu_custom_call.1} parent=47 // pred_check
          %p410 = pneg %p124
        $region58: #{tpu_custom_call.1} parent=47 // pred_check_branch
          %412 = sbr.rel (%p410) target = $region60
        $region59: #{tpu_custom_call.1} parent=47 // pred_region
          %413 = dma.done [#allocation6], 6144
        $region60: #{tpu_custom_call.1} parent=47 // pred_fallthru
          _
        // Predicated region
        $region61: #{tpu_custom_call.1} parent=47 // pred_check
          %p414 = pneg %p145
        $region62: #{tpu_custom_call.1} parent=47 // pred_check_branch
          %416 = sbr.rel (%p414) target = $region64
        $region63: #{tpu_custom_call.1} parent=47 // pred_region
          %417 = dma.done [#allocation9], 16
        $region64: #{tpu_custom_call.1} parent=47 // pred_fallthru
          _
        // Predicated region
        $region65: #{tpu_custom_call.1} parent=47 // pred_check
          %p418 = pneg %p166
        $region66: #{tpu_custom_call.1} parent=47 // pred_check_branch
          %420 = sbr.rel (%p418) target = $region68
        $region67: #{tpu_custom_call.1} parent=47 // pred_region
          %421 = dma.done [#allocation9], 16
        $region68: #{tpu_custom_call.1} parent=47 // pred_fallthru
          _
        // Predicated region
        $region69: #{tpu_custom_call.1} parent=47 // pred_check
          %p422 = pneg %p187
        $region70: #{tpu_custom_call.1} parent=47 // pred_check_branch
          %424 = sbr.rel (%p422) target = $region72
        $region71: #{tpu_custom_call.1} parent=47 // pred_region
          %425 = dma.done [#allocation12], 4096
        $region72: #{tpu_custom_call.1} parent=47 // pred_fallthru
          _
        // Predicated region
        $region73: #{tpu_custom_call.1} parent=47 // pred_check
          %p426 = pneg %p208
        $region74: #{tpu_custom_call.1} parent=47 // pred_check_branch
          %428 = sbr.rel (%p426) target = $region76
        $region75: #{tpu_custom_call.1} parent=47 // pred_region
          %429 = dma.done [#allocation12], 32
        $region76: #{tpu_custom_call.1} parent=47 // pred_fallthru
          _
        %s430 = sand.u32 %s62, 1
        %s431 = scalar_lea.sflag [#allocation3], %s430
        %s432 = sand.u32 %s62, 1
        %s433 = smul.addr %s432, 8
        %s434 = scalar_lea.vmem [#allocation2], %s433
        %p435 = pneg %p75
        %p436 = pneg %p72
        %s437 = sand.u32 %s34, 1
        %s438 = scalar_lea.sflag [#allocation6], %s437
        %s439 = sand.u32 %s90, 1
        %s440 = smul.addr %s439, 8
        %s441 = scalar_lea.vmem [#allocation5], %s440
        %p442 = pneg %p103
        %p443 = pneg %p100
        %p444 = pneg %p124
        %p445 = pneg %p121
        %p446 = pneg %p145
        %p447 = pneg %p142
        %p448 = pneg %p166
        %p449 = pneg %p163
        %p450 = pneg %p187
        %p451 = pneg %p184
        %p452 = pneg %p208
        %p453 = pneg %p205
        %p454 = pneg %p236
        %p455 = pneg %p233
        %s456 = sand.u32 %s223, 1
        %s457 = scalar_lea.sflag [#allocation4], %s456
        %s458 = sand.u32 %s223, 1
        %s459 = smul.addr %s458, 8
        %s460 = scalar_lea.vmem [#allocation14], %s459
        %p461 = pneg %p264
        %p462 = pneg %p261
        %s463 = sand.u32 %s251, 1
        %s464 = scalar_lea.sflag [#allocation16], %s463
        %s465 = sand.u32 %s251, 1
        %s466 = smul.addr %s465, 8
        %s467 = scalar_lea.vmem [#allocation15], %s466
        %s468 = ssub.s32 %s39, 1
        %p469 = scmp.gt.s32.totalorder %s468, 0
        %s470 = scalar_select %p469, %s468, 0
        %v471 = vld [vmem:[%s405] sm:$0xff]
        %v472 = vld [vmem:[%s396 + $0x4] sm:$0xf]
        %p473 = scmp.gt.s32.totalorder %s39, 0
        %s474 = scalar_select %p473, 1, 0
        %v475 = vstv %s474
        %vm476 = vcmp.eq.s32.totalorder %v475, 1
        %v477 = vsel %vm476, %v472, 0.0
        %v479 = vrot.slane %v471, 4
        %vm481 = vcmask 1043456
        %v482 = vsel %vm481, %v477, %v479
        %v484 = vrot.slane %v477, 2
        %v486 = vrot.slane %v471, 6
        %vm488 = vcmask 1041408
        %v489 = vsel %vm488, %v484, %v486
        %v490 = vld [vmem:[#allocation7] sm:$0xff]
        %v491 = vld [vmem:[#allocation7 + $0x8] sm:$0xff]
        %v492 = vld [vmem:[#allocation7 + $0x10] sm:$0xff]
        %v493 = vld [vmem:[#allocation7 + $0x18] sm:$0xff]
        %v494 = vld [vmem:[#allocation7 + $0x20] sm:$0xff]
        %v495 = vld [vmem:[#allocation7 + $0x28] sm:$0xff]
        %v496 = vld [vmem:[#allocation7 + $0x30] sm:$0xff]
        %v497 = vld [vmem:[#allocation7 + $0x38] sm:$0xff]
        %v498 = vld [vmem:[#allocation7 + $0x40] sm:$0xff]
        %v499 = vld [vmem:[#allocation7 + $0x48] sm:$0xff]
        %v500 = vld [vmem:[#allocation7 + $0x50] sm:$0xff]
        %v501 = vld [vmem:[#allocation7 + $0x58] sm:$0xff]
        %v502 = vld [vmem:[#allocation7 + $0x60] sm:$0xff]
        %v503 = vld [vmem:[#allocation7 + $0x68] sm:$0xff]
        %v504 = vld [vmem:[#allocation7 + $0x70] sm:$0xff]
        %v505 = vld [vmem:[#allocation7 + $0x78] sm:$0xff]
        %v506 = vld [vmem:[#allocation7 + $0x80] sm:$0xff]
        %v507 = vld [vmem:[#allocation7 + $0x88] sm:$0xff]
        %v508 = vld [vmem:[#allocation7 + $0x90] sm:$0xff]
        %v509 = vld [vmem:[#allocation7 + $0x98] sm:$0xff]
        %v510 = vld [vmem:[#allocation7 + $0xa0] sm:$0xff]
        %v511 = vld [vmem:[#allocation7 + $0xa8] sm:$0xff]
        %v512 = vld [vmem:[#allocation7 + $0xb0] sm:$0xff]
        %v513 = vld [vmem:[#allocation7 + $0xb8] sm:$0xff]
        %v514 = vld [vmem:[#allocation7 + $0xc0] sm:$0xff]
        %v515 = vld [vmem:[#allocation7 + $0xc8] sm:$0xff]
        %v516 = vld [vmem:[#allocation7 + $0xd0] sm:$0xff]
        %v517 = vld [vmem:[#allocation7 + $0xd8] sm:$0xff]
        %v518 = vld [vmem:[#allocation7 + $0xe0] sm:$0xff]
        %v519 = vld [vmem:[#allocation7 + $0xe8] sm:$0xff]
        %v520 = vld [vmem:[#allocation7 + $0xf0] sm:$0xff]
        %v521 = vld [vmem:[#allocation7 + $0xf8] sm:$0xff]
        %v522 = vld [vmem:[#allocation7 + $0x100] sm:$0xff]
        %v523 = vld [vmem:[#allocation7 + $0x108] sm:$0xff]
        %v524 = vld [vmem:[#allocation7 + $0x110] sm:$0xff]
        %v525 = vld [vmem:[#allocation7 + $0x118] sm:$0xff]
        %v526 = vld [vmem:[#allocation7 + $0x120] sm:$0xff]
        %v527 = vld [vmem:[#allocation7 + $0x128] sm:$0xff]
        %v528 = vld [vmem:[#allocation7 + $0x130] sm:$0xff]
        %v529 = vld [vmem:[#allocation7 + $0x138] sm:$0xff]
        %v530 = vld [vmem:[#allocation7 + $0x140] sm:$0xff]
        %v531 = vld [vmem:[#allocation7 + $0x148] sm:$0xff]
        %v532 = vld [vmem:[#allocation7 + $0x150] sm:$0xff]
        %v533 = vld [vmem:[#allocation7 + $0x158] sm:$0xff]
        %v534 = vld [vmem:[#allocation7 + $0x160] sm:$0xff]
        %v535 = vld [vmem:[#allocation7 + $0x168] sm:$0xff]
        %v536 = vld [vmem:[#allocation7 + $0x170] sm:$0xff]
        %v537 = vld [vmem:[#allocation7 + $0x178] sm:$0xff]
        %v538 = vld [vmem:[#allocation8] sm:$0x1]
        %v540 = vlaneseq
        %v541 = vshrl.u32 %v540, 7
        %v542 = vsub.s32 0, %v541
        %v543 = vrot.slane %v538, %v542
        %545 = vmatprep.subr.mxu0 0.0
        %546 = vmatpush1.msra.mxu0 %v490
        %547 = vmatprep.subr.mxu0 0.0
        %548 = vmatpush1.msra.mxu0 %v491
        %549 = vmatprep.subr.mxu0 0.0
        %550 = vmatpush1.msra.mxu0 %v492
        %551 = vmatprep.subr.mxu0 0.0
        %552 = vmatpush1.msra.mxu0 %v493
        %553 = vmatprep.subr.mxu0 0.0
        %554 = vmatpush1.msra.mxu0 %v494
        %555 = vmatprep.subr.mxu0 0.0
        %556 = vmatpush1.msra.mxu0 %v495
        %557 = vmatprep.subr.mxu0 0.0
        %558 = vmatpush1.msra.mxu0 %v496
        %559 = vmatprep.subr.mxu0 0.0
        %560 = vmatpush1.msra.mxu0 %v497
        %561 = vmatprep.subr.mxu0 0.0
        %562 = vmatpush1.msra.mxu0 %v498
        %563 = vmatprep.subr.mxu0 0.0
        %564 = vmatpush1.msra.mxu0 %v499
        %565 = vmatprep.subr.mxu0 0.0
        %566 = vmatpush1.msra.mxu0 %v500
        %567 = vmatprep.subr.mxu0 0.0
        %568 = vmatpush1.msra.mxu0 %v501
        %569 = vmatprep.subr.mxu0 0.0
        %570 = vmatpush1.msra.mxu0 %v502
        %571 = vmatprep.subr.mxu0 0.0
        %572 = vmatpush1.msra.mxu0 %v503
        %573 = vmatprep.subr.mxu0 0.0
        %574 = vmatpush1.msra.mxu0 %v504
        %575 = vmatprep.subr.mxu0 0.0
        %576 = vmatpush1.msra.mxu0 %v505
        %577 = vmatprep.subr.mxu0 0.0
        %578 = vmatpush1.msra.mxu0 %v506
        %579 = vmatprep.subr.mxu0 0.0
        %580 = vmatpush1.msra.mxu0 %v507
        %581 = vmatprep.subr.mxu0 0.0
        %582 = vmatpush1.msra.mxu0 %v508
        %583 = vmatprep.subr.mxu0 0.0
        %584 = vmatpush1.msra.mxu0 %v509
        %585 = vmatprep.subr.mxu0 0.0
        %586 = vmatpush1.msra.mxu0 %v510
        %587 = vmatprep.subr.mxu0 0.0
        %588 = vmatpush1.msra.mxu0 %v511
        %589 = vmatprep.subr.mxu0 0.0
        %590 = vmatpush1.msra.mxu0 %v512
        %591 = vmatprep.subr.mxu0 0.0
        %592 = vmatpush1.msra.mxu0 %v513
        %593 = vmatprep.subr.mxu0 0.0
        %594 = vmatpush1.msra.mxu0 %v514
        %595 = vmatprep.subr.mxu0 0.0
        %596 = vmatpush1.msra.mxu0 %v515
        %597 = vmatprep.subr.mxu0 0.0
        %598 = vmatpush1.msra.mxu0 %v516
        %599 = vmatprep.subr.mxu0 0.0
        %600 = vmatpush1.msra.mxu0 %v517
        %601 = vmatprep.subr.mxu0 0.0
        %602 = vmatpush1.msra.mxu0 %v518
        %603 = vmatprep.subr.mxu0 0.0
        %604 = vmatpush1.msra.mxu0 %v519
        %605 = vmatprep.subr.mxu0 0.0
        %606 = vmatpush1.msra.mxu0 %v520
        %607 = vmatprep.subr.mxu0 0.0
        %608 = vmatpush1.msra.mxu0 %v521
        %609 = vmatprep.mubr.f32.mxu0 %v489
        %610 = vmatmul.mubr.f32.gmra.mrb[0].mxu0 %v482
        %v611 = vpop.f32.mrb[0].mxu0
        %v612 = vadd.f32 %v543, %v611
        %v613 = vpop.f32.mrb[0].mxu0
        %614 = vdwg.mxu0
        %615 = vmatprep.subr.mxu0 0.0
        %616 = vmatpush1.msra.mxu0 %v522
        %617 = vmatprep.subr.mxu0 0.0
        %618 = vmatpush1.msra.mxu0 %v523
        %619 = vmatprep.subr.mxu0 0.0
        %620 = vmatpush1.msra.mxu0 %v524
        %621 = vmatprep.subr.mxu0 0.0
        %622 = vmatpush1.msra.mxu0 %v525
        %623 = vmatprep.subr.mxu0 0.0
        %624 = vmatpush1.msra.mxu0 %v526
        %625 = vmatprep.subr.mxu0 0.0
        %626 = vmatpush1.msra.mxu0 %v527
        %627 = vmatprep.subr.mxu0 0.0
        %628 = vmatpush1.msra.mxu0 %v528
        %629 = vmatprep.subr.mxu0 0.0
        %630 = vmatpush1.msra.mxu0 %v529
        %631 = vmatprep.subr.mxu0 0.0
        %632 = vmatpush1.msra.mxu0 %v530
        %633 = vmatprep.subr.mxu0 0.0
        %634 = vmatpush1.msra.mxu0 %v531
        %635 = vmatprep.subr.mxu0 0.0
        %636 = vmatpush1.msra.mxu0 %v532
        %637 = vmatprep.subr.mxu0 0.0
        %638 = vmatpush1.msra.mxu0 %v533
        %639 = vmatprep.subr.mxu0 0.0
        %640 = vmatpush1.msra.mxu0 %v534
        %641 = vmatprep.subr.mxu0 0.0
        %642 = vmatpush1.msra.mxu0 %v535
        %643 = vmatprep.subr.mxu0 0.0
        %644 = vmatpush1.msra.mxu0 %v536
        %645 = vmatprep.subr.mxu0 0.0
        %646 = vmatpush1.msra.mxu0 %v537
        %647 = vmatprep.subr.mxu0 0.0
        %648 = vmatpush1.msra.mxu0 0.0
        %649 = vmatprep.subr.mxu0 0.0
        %650 = vmatpush1.msra.mxu0 0.0
        %651 = vmatprep.subr.mxu0 0.0
        %652 = vmatpush1.msra.mxu0 0.0
        %653 = vmatprep.subr.mxu0 0.0
        %654 = vmatpush1.msra.mxu0 0.0
        %655 = vmatprep.subr.mxu0 0.0
        %656 = vmatpush1.msra.mxu0 0.0
        %657 = vmatprep.subr.mxu0 0.0
        %658 = vmatpush1.msra.mxu0 0.0
        %659 = vmatprep.subr.mxu0 0.0
        %660 = vmatpush1.msra.mxu0 0.0
        %661 = vmatprep.subr.mxu0 0.0
        %662 = vmatpush1.msra.mxu0 0.0
        %663 = vmatprep.subr.mxu0 0.0
        %664 = vmatpush1.msra.mxu0 0.0
        %665 = vmatprep.subr.mxu0 0.0
        %666 = vmatpush1.msra.mxu0 0.0
        %667 = vmatprep.subr.mxu0 0.0
        %668 = vmatpush1.msra.mxu0 0.0
        %669 = vmatprep.subr.mxu0 0.0
        %670 = vmatpush1.msra.mxu0 0.0
        %671 = vmatprep.subr.mxu0 0.0
        %672 = vmatpush1.msra.mxu0 0.0
        %673 = vmatprep.subr.mxu0 0.0
        %674 = vmatpush1.msra.mxu0 0.0
        %675 = vmatprep.subr.mxu0 0.0
        %676 = vmatpush1.msra.mxu0 0.0
        %677 = vmatprep.subr.mxu0 0.0
        %678 = vmatpush1.msra.mxu0 0.0
        %679 = vmatprep.mubr.f32.mxu0 0.0
        %680 = vmatmul.mubr.f32.gmra.mrb[0].mxu0 %v471
        %v681 = vpop.f32.mrb[0].mxu0
        %v682 = vadd.f32 %v612, %v681
        %v683 = vpop.f32.mrb[0].mxu0
        %684 = vdwg.mxu0
        %vm685 = vcmp.gt.f32.partialorder %v682, 0.0
        %v686 = vld [vmem:[#allocation10] sm:$0x1]
        %v688 = vlaneseq
        %v689 = vshrl.u32 %v688, 7
        %v690 = vsub.s32 0, %v689
        %v691 = vrot.slane %v686, %v690
        %v693 = vmul.f32 %v691, %v682
        %v694 = vsel %vm685, %v682, %v693
        %v695 = vld [vmem:[#allocation11] sm:$0xff]
        %v696 = vld [vmem:[#allocation11 + $0x8] sm:$0xff]
        %v697 = vld [vmem:[#allocation11 + $0x10] sm:$0xff]
        %v698 = vld [vmem:[#allocation11 + $0x18] sm:$0xff]
        %v699 = vld [vmem:[#allocation11 + $0x20] sm:$0xff]
        %v700 = vld [vmem:[#allocation11 + $0x28] sm:$0xff]
        %v701 = vld [vmem:[#allocation11 + $0x30] sm:$0xff]
        %v702 = vld [vmem:[#allocation11 + $0x38] sm:$0xff]
        %v703 = vld [vmem:[#allocation11 + $0x40] sm:$0xff]
        %v704 = vld [vmem:[#allocation11 + $0x48] sm:$0xff]
        %v705 = vld [vmem:[#allocation11 + $0x50] sm:$0xff]
        %v706 = vld [vmem:[#allocation11 + $0x58] sm:$0xff]
        %v707 = vld [vmem:[#allocation11 + $0x60] sm:$0xff]
        %v708 = vld [vmem:[#allocation11 + $0x68] sm:$0xff]
        %v709 = vld [vmem:[#allocation11 + $0x70] sm:$0xff]
        %v710 = vld [vmem:[#allocation11 + $0x78] sm:$0xff]
        %v711 = vld [vmem:[#allocation11 + $0x80] sm:$0xff]
        %v712 = vld [vmem:[#allocation11 + $0x88] sm:$0xff]
        %v713 = vld [vmem:[#allocation11 + $0x90] sm:$0xff]
        %v714 = vld [vmem:[#allocation11 + $0x98] sm:$0xff]
        %v715 = vld [vmem:[#allocation11 + $0xa0] sm:$0xff]
        %v716 = vld [vmem:[#allocation11 + $0xa8] sm:$0xff]
        %v717 = vld [vmem:[#allocation11 + $0xb0] sm:$0xff]
        %v718 = vld [vmem:[#allocation11 + $0xb8] sm:$0xff]
        %v719 = vld [vmem:[#allocation11 + $0xc0] sm:$0xff]
        %v720 = vld [vmem:[#allocation11 + $0xc8] sm:$0xff]
        %v721 = vld [vmem:[#allocation11 + $0xd0] sm:$0xff]
        %v722 = vld [vmem:[#allocation11 + $0xd8] sm:$0xff]
        %v723 = vld [vmem:[#allocation11 + $0xe0] sm:$0xff]
        %v724 = vld [vmem:[#allocation11 + $0xe8] sm:$0xff]
        %v725 = vld [vmem:[#allocation11 + $0xf0] sm:$0xff]
        %v726 = vld [vmem:[#allocation11 + $0xf8] sm:$0xff]
        %v727 = vld [vmem:[#allocation13] sm:$0x3]
        %v729 = vlaneseq
        %v730 = vshrl.u32 %v729, 7
        %v731 = vsub.s32 0, %v730
        %v732 = vrot.slane %v727, %v731
        %v733 = vlaneseq
        %v734 = vshrl.u32 %v733, 7
        %v735 = vsub.s32 1, %v734
        %v736 = vrot.slane %v727, %v735
        %739 = vmatprep.subr.mxu0 %v696
        %740 = vmatpush1.msra.mxu0 %v695
        %741 = vmatprep.subr.mxu0 %v698
        %742 = vmatpush1.msra.mxu0 %v697
        %743 = vmatprep.subr.mxu0 %v700
        %744 = vmatpush1.msra.mxu0 %v699
        %745 = vmatprep.subr.mxu0 %v702
        %746 = vmatpush1.msra.mxu0 %v701
        %747 = vmatprep.subr.mxu0 %v704
        %748 = vmatpush1.msra.mxu0 %v703
        %749 = vmatprep.subr.mxu0 %v706
        %750 = vmatpush1.msra.mxu0 %v705
        %751 = vmatprep.subr.mxu0 %v708
        %752 = vmatpush1.msra.mxu0 %v707
        %753 = vmatprep.subr.mxu0 %v710
        %754 = vmatpush1.msra.mxu0 %v709
        %755 = vmatprep.subr.mxu0 %v712
        %756 = vmatpush1.msra.mxu0 %v711
        %757 = vmatprep.subr.mxu0 %v714
        %758 = vmatpush1.msra.mxu0 %v713
        %759 = vmatprep.subr.mxu0 %v716
        %760 = vmatpush1.msra.mxu0 %v715
        %761 = vmatprep.subr.mxu0 %v718
        %762 = vmatpush1.msra.mxu0 %v717
        %763 = vmatprep.subr.mxu0 %v720
        %764 = vmatpush1.msra.mxu0 %v719
        %765 = vmatprep.subr.mxu0 %v722
        %766 = vmatpush1.msra.mxu0 %v721
        %767 = vmatprep.subr.mxu0 %v724
        %768 = vmatpush1.msra.mxu0 %v723
        %769 = vmatprep.subr.mxu0 %v726
        %770 = vmatpush1.msra.mxu0 %v725
        %771 = vmatprep.subr.mxu0 0.0
        %772 = vmatpush1.msra.mxu0 0.0
        %773 = vmatprep.subr.mxu0 0.0
        %774 = vmatpush1.msra.mxu0 0.0
        %775 = vmatprep.subr.mxu0 0.0
        %776 = vmatpush1.msra.mxu0 0.0
        %777 = vmatprep.subr.mxu0 0.0
        %778 = vmatpush1.msra.mxu0 0.0
        %779 = vmatprep.subr.mxu0 0.0
        %780 = vmatpush1.msra.mxu0 0.0
        %781 = vmatprep.subr.mxu0 0.0
        %782 = vmatpush1.msra.mxu0 0.0
        %783 = vmatprep.subr.mxu0 0.0
        %784 = vmatpush1.msra.mxu0 0.0
        %785 = vmatprep.subr.mxu0 0.0
        %786 = vmatpush1.msra.mxu0 0.0
        %787 = vmatprep.subr.mxu0 0.0
        %788 = vmatpush1.msra.mxu0 0.0
        %789 = vmatprep.subr.mxu0 0.0
        %790 = vmatpush1.msra.mxu0 0.0
        %791 = vmatprep.subr.mxu0 0.0
        %792 = vmatpush1.msra.mxu0 0.0
        %793 = vmatprep.subr.mxu0 0.0
        %794 = vmatpush1.msra.mxu0 0.0
        %795 = vmatprep.subr.mxu0 0.0
        %796 = vmatpush1.msra.mxu0 0.0
        %797 = vmatprep.subr.mxu0 0.0
        %798 = vmatpush1.msra.mxu0 0.0
        %799 = vmatprep.subr.mxu0 0.0
        %800 = vmatpush1.msra.mxu0 0.0
        %801 = vmatprep.subr.mxu0 0.0
        %802 = vmatpush1.msra.mxu0 0.0
        %803 = vmatprep.mubr.f32.mxu0 0.0
        %804 = vmatmul.mubr.f32.gmra.mrb[0].mxu0 %v694
        %v805 = vpop.f32.mrb[0].mxu0
        %v806 = vadd.f32 %v732, %v805
        %v807 = vpop.f32.mrb[0].mxu0
        %v808 = vadd.f32 %v736, %v807
        %809 = vdwg.mxu0
        %v810 = vadd.f32 %v471, %v806
        %811 = vst [vmem:[%s460] sm:$0xff] %v810
        %812 = vst [vmem:[%s467] sm:$0xff] %v808
        %s813 = sand.u32 %s223, 1
        %s814 = scalar_lea.sflag [#allocation4], %s813
        %s815 = sand.u32 %s223, 1
        %s816 = smul.addr %s815, 8
        %s817 = scalar_lea.vmem [#allocation14], %s816
        %s818 = sand.u32 %s251, 1
        %s819 = scalar_lea.sflag [#allocation16], %s818
        %s820 = sand.u32 %s251, 1
        %s821 = smul.addr %s820, 8
        %s822 = scalar_lea.vmem [#allocation15], %s821
        // Predicated region
        $region77: #{tpu_custom_call.1} parent=47 // pred_check
          %p823 = pneg %p233
        $region78: #{tpu_custom_call.1} parent=47 // pred_check_branch
          %825 = sbr.rel (%p823) target = $region80
        $region79: #{tpu_custom_call.1} parent=47 // pred_region
          %s827 = ssub.s32 128, 128
          %828 = vsyncadd %s814, %s827
          %s829 = smul.addr %s38, 2
          %s830 = sadd.s32 %s39, %s829
          %s831 = smul.addr %s830, 128
          %s832 = scalar_lea.hbm %s7, %s831
          %s834 = sshll.u32 %s817, 4
          %s835 = int_to_ptr.vmem [resolvable:$true] %s834
          %837 = dma.vmem_to_hbm [thread:$0]  %s835, 128, %s832, %s814
        $region80: #{tpu_custom_call.1} parent=47 // pred_fallthru
          _
        // Predicated region
        $region81: #{tpu_custom_call.1} parent=47 // pred_check
          %p838 = pneg %p261
        $region82: #{tpu_custom_call.1} parent=47 // pred_check_branch
          %840 = sbr.rel (%p838) target = $region84
        $region83: #{tpu_custom_call.1} parent=47 // pred_region
          %s842 = ssub.s32 128, 128
          %843 = vsyncadd %s819, %s842
          %s844 = smul.addr %s38, 2
          %s845 = sadd.s32 %s39, %s844
          %s846 = smul.addr %s845, 128
          %s847 = scalar_lea.hbm %s8, %s846
          %s849 = sshll.u32 %s822, 4
          %s850 = int_to_ptr.vmem [resolvable:$true] %s849
          %852 = dma.vmem_to_hbm [thread:$0]  %s850, 128, %s847, %s819
        $region84: #{tpu_custom_call.1} parent=47 // pred_fallthru
          _
      $region48: #{tpu_custom_call.1} parent=5 // pred_fallthru
        _
      %p853 = scmp.le.s32.totalorder 2, %s29
      // Predicated region
      $region85: #{tpu_custom_call.1} parent=5 // pred_check
        %p854 = pneg %p853
      $region86: #{tpu_custom_call.1} parent=5 // pred_check_branch
        %856 = sbr.rel (%p854) target = $region88
      $region87: #{tpu_custom_call.1} parent=5 // pred_region
        %s857 = ssub.s32 %s29, 2
        // Predicated region
        $region89: #{tpu_custom_call.1} parent=87 // pred_check
          %p858 = pneg %p239
        $region90: #{tpu_custom_call.1} parent=87 // pred_check_branch
          %860 = sbr.rel (%p858) target = $region92
        $region91: #{tpu_custom_call.1} parent=87 // pred_region
          %s861 = sand.u32 %s224, 1
          %s862 = scalar_lea.sflag [#allocation4], %s861
          %s863 = sand.u32 %s224, 1
          %s864 = smul.addr %s863, 8
          %s865 = scalar_lea.vmem [#allocation14], %s864
          %866 = dma.done %s862, 128
        $region92: #{tpu_custom_call.1} parent=87 // pred_fallthru
          _
        // Predicated region
        $region93: #{tpu_custom_call.1} parent=87 // pred_check
          %p867 = pneg %p267
        $region94: #{tpu_custom_call.1} parent=87 // pred_check_branch
          %869 = sbr.rel (%p867) target = $region96
        $region95: #{tpu_custom_call.1} parent=87 // pred_region
          %s870 = sand.u32 %s252, 1
          %s871 = scalar_lea.sflag [#allocation16], %s870
          %s872 = sand.u32 %s252, 1
          %s873 = smul.addr %s872, 8
          %s874 = scalar_lea.vmem [#allocation15], %s873
          %875 = dma.done %s871, 128
        $region96: #{tpu_custom_call.1} parent=87 // pred_fallthru
          _
      $region88: #{tpu_custom_call.1} parent=5 // pred_fallthru
        _
    $region6: #{tpu_custom_call.1} parent=1 // loop_footer
      %s33 = sadd.s32 1, %s29
    $region7: #{tpu_custom_call.1} parent=1 // loop_footer_branch
      %28 = sbr.rel target = $region3
    $region8: #{tpu_custom_call.1} parent=1 // loop_exit
      _
    %876 = vsyncpa [#allocation3], 1
    %s877 = scalar_lea.sflag [#allocation3], 1
    %878 = vsyncpa %s877, 1
    %879 = vsyncpa [#allocation6], 1
    %s880 = scalar_lea.sflag [#allocation6], 1
    %881 = vsyncpa %s880, 1
    %882 = vsyncpa [#allocation9], 1
    %883 = vsyncpa [#allocation12], 1
    %884 = vsyncpa [#allocation4], 1
    %s885 = scalar_lea.sflag [#allocation4], 1
    %886 = vsyncpa %s885, 1
    %887 = vsyncpa [#allocation16], 1
    %s888 = scalar_lea.sflag [#allocation16], 1
    %889 = vsyncpa %s888, 1

</llo_original>
